<compile_context>
chip_gen: v7x
topology: tpu7x:2x2x1
jax: 0.10.0
libtpu: 0.0.40
codegen_flags: <defaults>
</compile_context>

<pallas_src>
import jax
import jax.numpy as jnp
from jax.experimental import pallas as pl
from jax.experimental.pallas import tpu as pltpu


def coordgate_kernel(wc_ref, bc_ref, gate_ref, x_ref, o_ref):
    # x_ref, gate_ref: (C, T); wc_ref: (Cout, C); bc_ref: (Cout, 1);
    # o_ref: (Cout, T).
    xg = x_ref[...] * gate_ref[...]                       # (C, T), VPU
    # 1x1 conv over channels as a single dense contraction on the MXU:
    #   y = wc @ (x * gate) + bc
    y = jnp.dot(
        wc_ref[...], xg,
        preferred_element_type=jnp.float32,
        precision=jax.lax.Precision.HIGHEST,
    ) + bc_ref[...]
    o_ref[...] = y.astype(o_ref.dtype)                    # one full-block store


def coord_gate_forward(x_nchw, params):
    """x_nchw: (B, Cin, H, W). Returns (B, Cout, H, W)."""
    w0, b0, w1, b1, wc, bc = params
    B, C, H, W = x_nchw.shape
    Cout = wc.shape[0]
    HW = H * W
    dtype = x_nchw.dtype

    # ---- gate MLP (hoisted, one-time work, f32 for parity with PT encoder) --
    xs = jnp.linspace(-1.0, 1.0, H, dtype=jnp.float32)
    ys = jnp.linspace(-1.0, 1.0, W, dtype=jnp.float32)
    gx, gy = jnp.meshgrid(xs, ys, indexing="ij")
    pos = jnp.stack([gx, gy], axis=-1).reshape(HW, 2)
    g = pos @ w0.astype(jnp.float32) + b0.astype(jnp.float32)
    g = g @ w1.astype(jnp.float32) + b1.astype(jnp.float32)
    gate = jnp.maximum(g, 0.0).T.astype(dtype)            # (C, HW), channels-first

    # ---- channels-first, HW-on-lanes layout (pure reshape, no transpose) ----
    x_cf = x_nchw.reshape(B, C, HW)

    # ---- tile selection -----------------------------------------------------
    LANE, SUB = 128, 8
    hw128 = ((HW + LANE - 1) // LANE) * LANE
    # VMEM budget with physical 8-sublane padding of the channel dims:
    # double-buffered x + gate + out blocks, f32.
    c_pad = ((C + SUB - 1) // SUB) * SUB
    co_pad = ((Cout + SUB - 1) // SUB) * SUB
    bytes_per_col = 4 * 2 * (2 * c_pad + co_pad)
    budget = 24 * 1024 * 1024                 # block budget, safe on v7x 64 MiB VMEM
    max_t = max(LANE, (budget // bytes_per_col) // LANE * LANE)
    # Largest T that is a multiple of 128, divides hw128 exactly (so no extra
    # pad copy beyond the minimal 128-lane alignment), and fits the budget.
    n128 = hw128 // LANE
    best_d = 1
    for d in range(1, n128 + 1):
        if n128 % d == 0 and d * LANE <= max_t:
            best_d = d
    T = best_d * LANE
    n_t = hw128 // T

    if hw128 != HW:
        # Minimal 128-lane pad only (no-op when HW % 128 == 0).
        # TODO(synk): the ragged last tile could be masked in-kernel to avoid
        # even this copy.
        x_cf = jnp.pad(x_cf, ((0, 0), (0, 0), (0, hw128 - HW)))
        gate = jnp.pad(gate, ((0, 0), (0, hw128 - HW)))

    bc2 = bc.reshape(Cout, 1).astype(dtype)

    out = pl.pallas_call(
        coordgate_kernel,
        out_shape=jax.ShapeDtypeStruct((B, Cout, hw128), dtype),
        grid_spec=pltpu.PrefetchScalarGridSpec(
            num_scalar_prefetch=0,
            grid=(n_t, B),                    # tile outer -> gate reused across batch
            in_specs=[
                pl.BlockSpec(memory_space=pltpu.MemorySpace.VMEM),      # wc (Cout, C)
                pl.BlockSpec(memory_space=pltpu.MemorySpace.VMEM),      # bc (Cout, 1)
                pl.BlockSpec((C, T), lambda t, b: (0, t)),              # gate
                pl.BlockSpec((None, C, T), lambda t, b: (b, 0, t)),     # x
            ],
            out_specs=pl.BlockSpec((None, Cout, T), lambda t, b: (b, 0, t)),
        ),
        compiler_params=pltpu.CompilerParams(
            dimension_semantics=("parallel", "parallel"),
            vmem_limit_bytes=32 * 1024 * 1024),
    )(wc, bc2, gate, x_cf)

    return out[:, :, :HW].reshape(B, Cout, H, W)


def coord_gate_reference(x_nchw, params):
    """Pure-JAX reference matching the PyTorch forward (enctype='pos')."""
    w0, b0, w1, b1, wc, bc = params
    B, C, H, W = x_nchw.shape
    xs = jnp.linspace(-1.0, 1.0, H, dtype=jnp.float32)
    ys = jnp.linspace(-1.0, 1.0, W, dtype=jnp.float32)
    gx, gy = jnp.meshgrid(xs, ys, indexing="ij")
    pos = jnp.stack([gx, gy], axis=-1).reshape(-1, 2)
    g = pos @ w0.astype(jnp.float32) + b0.astype(jnp.float32)
    g = g @ w1.astype(jnp.float32) + b1.astype(jnp.float32)
    gate = jnp.maximum(g, 0.0).reshape(1, H, W, C).transpose(0, 3, 1, 2)
    gate = gate.astype(x_nchw.dtype)
    xg = x_nchw * gate
    y = jnp.einsum("bchw,oc->bohw", xg, wc,
                   precision=jax.lax.Precision.HIGHEST) + bc[None, :, None, None]
    return y


if __name__ == "__main__":
    B, C, H, W = 2, 4, 16, 16       # enc_channels = out_channels = 4
    Cout = 4
    key = jax.random.PRNGKey(0)
    kx, k0, kb0, k1, kb1, kc, kbc = jax.random.split(key, 7)

    x = jax.random.normal(kx, (B, C, H, W), dtype=jnp.float32)

    # Synthetic parameters: 2-layer positional MLP + 1x1 conv.
    # w0/w1 are stored pre-transposed ((in, out), i.e. PyTorch Linear W.T);
    # wc matches PyTorch Conv2d weight[o, c, 0, 0]; biases are 1-D.
    w0 = jax.random.normal(k0, (2, C), dtype=jnp.float32) * 0.5
    b0 = jax.random.normal(kb0, (C,), dtype=jnp.float32) * 0.1
    w1 = jax.random.normal(k1, (C, C), dtype=jnp.float32) * 0.5
    b1 = jax.random.normal(kb1, (C,), dtype=jnp.float32) * 0.1
    wc = jax.random.normal(kc, (Cout, C), dtype=jnp.float32) * 0.5
    bc = jax.random.normal(kbc, (Cout,), dtype=jnp.float32) * 0.1
    params = (w0, b0, w1, b1, wc, bc)

    y = coord_gate_forward(x, params)
    y = jax.block_until_ready(y)

    y_ref = coord_gate_reference(x, params)
    assert y.shape == (B, Cout, H, W)
    assert jnp.allclose(y, y_ref, atol=1e-4, rtol=1e-4), "mismatch vs reference"

    print("KERNEL_OK")
</pallas_src>

<mosaic_0001>
module attributes {stable_mosaic.version = 11 : i64} {
  func.func @coordgate_kernel(%arg0: i32, %arg1: i32, %arg2: memref<4x4xf32, #tpu.memory_space<vmem>>, %arg3: memref<4x1xf32, #tpu.memory_space<vmem>>, %arg4: memref<4x256xf32, #tpu.memory_space<vmem>>, %arg5: memref<1x4x256xf32, #tpu.memory_space<vmem>>, %arg6: memref<1x4x256xf32, #tpu.memory_space<vmem>>) attributes {dimension_semantics = [#tpu.dimension_semantics<parallel>, #tpu.dimension_semantics<parallel>], iteration_bounds = array<i64: 1, 2>, scalar_prefetch = 0 : i64, scratch_operands = 0 : i64, tpu.core_type = #tpu.core_type<tc>, window_params = [{pipeline_mode = #tpu.pipeline_mode<synchronous>, transform_indices = @transform_0, window_bounds = array<i64: 4, 4>}, {pipeline_mode = #tpu.pipeline_mode<synchronous>, transform_indices = @transform_1, window_bounds = array<i64: 4, 1>}, {transform_indices = @transform_2, window_bounds = array<i64: 4, 256>}, {transform_indices = @transform_3, window_bounds = array<i64: 1, 4, 256>}, {transform_indices = @transform_4, window_bounds = array<i64: 1, 4, 256>}]} {
    %c0 = arith.constant 0 : index
    %c0_0 = arith.constant 0 : index
    %c0_1 = arith.constant 0 : index
    %0 = vector.load %arg5[%c0, %c0_0, %c0_1] : memref<1x4x256xf32, #tpu.memory_space<vmem>>, vector<1x4x256xf32>
    %1 = vector.shape_cast %0 : vector<1x4x256xf32> to vector<4x256xf32>
    %c0_2 = arith.constant 0 : index
    %c0_3 = arith.constant 0 : index
    %2 = vector.load %arg4[%c0_2, %c0_3] : memref<4x256xf32, #tpu.memory_space<vmem>>, vector<4x256xf32>
    %3 = arith.mulf %1, %2 : vector<4x256xf32>
    %c0_4 = arith.constant 0 : index
    %c0_5 = arith.constant 0 : index
    %4 = vector.load %arg2[%c0_4, %c0_5] : memref<4x4xf32, #tpu.memory_space<vmem>>, vector<4x4xf32>
    %cst = arith.constant dense<0.000000e+00> : vector<4x256xf32>
    %5 = tpu.matmul %4, %3, %cst {dimension_numbers = #tpu.dot_dimension_numbers<[1], [0], [0], [1], [0, 0, 1, 1], [], []>, precision = #tpu.contract_precision<fp32>} : vector<4x4xf32>, vector<4x256xf32>, vector<4x256xf32> -> vector<4x256xf32>
    %c0_6 = arith.constant 0 : index
    %c0_7 = arith.constant 0 : index
    %6 = vector.load %arg3[%c0_6, %c0_7] : memref<4x1xf32, #tpu.memory_space<vmem>>, vector<4x1xf32>
    %7 = vector.broadcast %6 : vector<4x1xf32> to vector<4x256xf32>
    %8 = arith.addf %5, %7 : vector<4x256xf32>
    %c0_8 = arith.constant 0 : index
    %c0_9 = arith.constant 0 : index
    %c0_10 = arith.constant 0 : index
    %9 = vector.load %arg6[%c0_8, %c0_9, %c0_10] : memref<1x4x256xf32, #tpu.memory_space<vmem>>, vector<1x4x256xf32>
    %10 = vector.shape_cast %9 : vector<1x4x256xf32> to vector<4x256xf32>
    %11 = vector.shape_cast %8 : vector<4x256xf32> to vector<1x4x256xf32>
    tpu.vector_store %arg6[%c0_8, %c0_9, %c0_10], %11 {strides = array<i32>} : memref<1x4x256xf32, #tpu.memory_space<vmem>>, vector<1x4x256xf32>,
    return
  }
  func.func @transform_0(%arg0: i32, %arg1: i32) -> (i32, i32) {
    %c0_i32 = arith.constant 0 : i32
    %c0_i32_0 = arith.constant 0 : i32
    %c0_i32_1 = arith.constant 0 : i32
    return %c0_i32, %c0_i32_0 : i32, i32
  }
  func.func @transform_1(%arg0: i32, %arg1: i32) -> (i32, i32) {
    %c0_i32 = arith.constant 0 : i32
    %c0_i32_0 = arith.constant 0 : i32
    %c0_i32_1 = arith.constant 0 : i32
    return %c0_i32, %c0_i32_0 : i32, i32
  }
  func.func @transform_2(%arg0: i32, %arg1: i32) -> (i32, i32) {
    %c0_i32 = arith.constant 0 : i32
    %c0_i32_0 = arith.constant 0 : i32
    return %c0_i32, %arg0 : i32, i32
  }
  func.func @transform_3(%arg0: i32, %arg1: i32) -> (i32, i32, i32) {
    %c0_i32 = arith.constant 0 : i32
    %c0_i32_0 = arith.constant 0 : i32
    return %arg1, %c0_i32, %arg0 : i32, i32, i32
  }
  func.func @transform_4(%arg0: i32, %arg1: i32) -> (i32, i32, i32) {
    %c0_i32 = arith.constant 0 : i32
    %c0_i32_0 = arith.constant 0 : i32
    return %arg1, %c0_i32, %arg0 : i32, i32, i32
  }
}

</mosaic_0001>

<llo_original>
// kernel: tpu_custom_call.1
$region0: #{tpu_custom_call.1}
  #allocation0 [shape = 'u32[]', space=smem, size = 0x4, offset = 0x4, fixed_abs, tag = 'smem constant byte address 0x4 - core index']
  #allocation1 [shape = 'u32[144,128]{1,0:T(1,128)}', space=vmem, size = 0x12000, scoped, tag = 'internal scratch']
  %s0 = inlined_call_operand.hbm [shape: f32[4,4], index: 0, kind: input, shape index: {}]
  %s1 = inlined_call_operand.vmem [shape: f32[4,1], index: 1, kind: input, shape index: {}]
  %s2 = inlined_call_operand.hbm [shape: f32[4,256], index: 2, kind: input, shape index: {}]
  %s3 = inlined_call_operand.vmem [shape: f32[2,4,256], index: 3, kind: input, shape index: {}]
  %s4 = inlined_call_operand.hbm [shape: f32[2,4,256], index: 4, kind: output, shape index: {}]
  %s5 = sld [smem:[#allocation0]]
  $region57: #{tpu_custom_call.1} parent=0
    _
  %s7 = ssub.s32 1, %s5
  %s8 = scalar_select 0, %s7, %s5
  $region1: #{tpu_custom_call.1} parent=0
    #allocation2 [shape = 'u8[2048]{0}', space=vmem, size = 0x800, scoped, tag = 'input window, operand 0, single buffered']
    #allocation3 [shape = 's32[2]{0}', space=sflag, size = 0x8, scoped, tag = 'scoped memory for tpu_custom_call.1']
    #allocation4 [shape = 's32[2]{0}', space=sflag, size = 0x8, scoped, tag = 'scoped memory for tpu_custom_call.1']
    #allocation5 [shape = 'u8[4096]{0}', space=vmem, size = 0x1000, scoped, tag = 'input window, operand 2, single buffered']
    #allocation6 [shape = 's32[1]{0}', space=sflag, size = 0x4, scoped, tag = 'scoped memory for tpu_custom_call.1']
    #allocation7 [shape = 'u8[8192]{0}', space=vmem, size = 0x2000, scoped, tag = 'output window, operand 0']
    %9 = vsyncpa [#allocation3], 0
    %10 = vsyncpa [#allocation6], 0
    %11 = vsyncpa [#allocation4], 0
    %s12 = scalar_lea.sflag [#allocation4], 1
    %13 = vsyncpa %s12, 0
    loop: start=0, step=1, limit=4
    $region2: #{tpu_custom_call.1} parent=1 // loop_pre_header
      _
    $region3: #{tpu_custom_call.1} parent=1 // loop_header
      %s15 = sphi 0, %s19
      %p16 = scmp.ge.s32.totalorder %s15, 4
      %s22 = sphi 0, %s34
      %s23 = sphi 0, %s30
      %s24 = sphi 0, %s22
      %s25 = sphi 0, %s23
      %s26 = sphi 0, %s24
      %s27 = sphi 0, %s25
      %s35 = sphi 0, %s35
      %s37 = sphi 0, %s35
      %s38 = sphi 0, %s37
      %s52 = sphi 0, %s38
      %s56 = sphi 0, %s56
      %s58 = sphi 0, %s56
      %s59 = sphi 0, %s58
      %s73 = sphi 0, %s59
      %s79 = sphi 0, %s81
      %s82 = sphi 0, %s79
      %s83 = sphi 0, %s82
      %s99 = sphi 0, %s83
      %s107 = sphi 0, %s109
      %s110 = sphi 0, %s107
      %s111 = sphi 0, %s110
      %s127 = sphi 0, %s111
      %s135 = sphi 0, %s137
      %s138 = sphi 0, %s135
      %s139 = sphi 0, %s138
      %s155 = sphi 0, %s139
    $region4: #{tpu_custom_call.1} parent=1 // loop_header_branch
      %18 = sbr.rel (%p16) target = $region8
    $region5: #{tpu_custom_call.1} parent=1 // loop_body
      %s20 = ssub.s32 %s15, 1
      %s21 = ssub.s32 %s15, 2
      %s28 = sadd.s32 1, %s23
      %p29 = scmp.ge.s32.totalorder %s28, 2
      %s30 = scalar_select %p29, 0, %s28
      %s31 = sadd.s32 1, %s22
      %s32 = scalar_select %p29, %s31, %s22
      %p33 = scmp.ge.s32.totalorder %s32, 1
      %s34 = scalar_select %p33, 0, %s32
      %s36 = sadd.s32 %s35, 1
      %p39 = scmp.eq.s32.totalorder %s15, 1
      %p40 = scmp.ne.s32.totalorder %s35, %s37
      %p41 = scmp.eq.s32.totalorder %s15, 0
      %p42 = por %p40, %p41
      %p43 = scmp.ne.s32.totalorder %s35, %s37
      %p44 = scmp.eq.s32.totalorder %s20, 1
      %p45 = por %p43, %p44
      %p46 = scmp.ne.s32.totalorder %s37, %s38
      %p47 = scmp.eq.s32.totalorder %s20, 0
      %p48 = por %p46, %p47
      %p49 = scmp.ne.s32.totalorder %s37, %s38
      %p50 = scmp.eq.s32.totalorder %s21, 1
      %p51 = por %p49, %p50
      %p53 = scmp.ne.s32.totalorder %s38, %s52
      %p54 = scmp.eq.s32.totalorder %s21, 0
      %p55 = por %p53, %p54
      %s57 = sadd.s32 %s56, 1
      %p60 = scmp.eq.s32.totalorder %s15, 1
      %p61 = scmp.ne.s32.totalorder %s56, %s58
      %p62 = scmp.eq.s32.totalorder %s15, 0
      %p63 = por %p61, %p62
      %p64 = scmp.ne.s32.totalorder %s56, %s58
      %p65 = scmp.eq.s32.totalorder %s20, 1
      %p66 = por %p64, %p65
      %p67 = scmp.ne.s32.totalorder %s58, %s59
      %p68 = scmp.eq.s32.totalorder %s20, 0
      %p69 = por %p67, %p68
      %p70 = scmp.ne.s32.totalorder %s58, %s59
      %p71 = scmp.eq.s32.totalorder %s21, 1
      %p72 = por %p70, %p71
      %p74 = scmp.ne.s32.totalorder %s59, %s73
      %p75 = scmp.eq.s32.totalorder %s21, 0
      %p76 = por %p74, %p75
      %s77 = ssub.s32 %s22, %s34
      %p78 = scmp.eq.s32.totalorder %s77, 0
      %s80 = sadd.s32 %s79, 1
      %s81 = scalar_select %p78, %s79, %s80
      %p84 = pneg %p78
      %p85 = scmp.eq.s32.totalorder %s15, 1
      %p86 = por %p84, %p85
      %p87 = scmp.ne.s32.totalorder %s79, %s82
      %p88 = scmp.eq.s32.totalorder %s15, 0
      %p89 = por %p87, %p88
      %p90 = scmp.ne.s32.totalorder %s79, %s82
      %p91 = scmp.eq.s32.totalorder %s20, 1
      %p92 = por %p90, %p91
      %p93 = scmp.ne.s32.totalorder %s82, %s83
      %p94 = scmp.eq.s32.totalorder %s20, 0
      %p95 = por %p93, %p94
      %p96 = scmp.ne.s32.totalorder %s82, %s83
      %p97 = scmp.eq.s32.totalorder %s21, 1
      %p98 = por %p96, %p97
      %p100 = scmp.ne.s32.totalorder %s83, %s99
      %p101 = scmp.eq.s32.totalorder %s21, 0
      %p102 = por %p100, %p101
      %s103 = ssub.s32 %s23, %s30
      %s104 = ssub.s32 %s22, %s34
      %s105 = sor.u32 %s103, %s104
      %p106 = scmp.eq.s32.totalorder %s105, 0
      %s108 = sadd.s32 %s107, 1
      %s109 = scalar_select %p106, %s107, %s108
      %p112 = pneg %p106
      %p113 = scmp.eq.s32.totalorder %s15, 1
      %p114 = por %p112, %p113
      %p115 = scmp.ne.s32.totalorder %s107, %s110
      %p116 = scmp.eq.s32.totalorder %s15, 0
      %p117 = por %p115, %p116
      %p118 = scmp.ne.s32.totalorder %s107, %s110
      %p119 = scmp.eq.s32.totalorder %s20, 1
      %p120 = por %p118, %p119
      %p121 = scmp.ne.s32.totalorder %s110, %s111
      %p122 = scmp.eq.s32.totalorder %s20, 0
      %p123 = por %p121, %p122
      %p124 = scmp.ne.s32.totalorder %s110, %s111
      %p125 = scmp.eq.s32.totalorder %s21, 1
      %p126 = por %p124, %p125
      %p128 = scmp.ne.s32.totalorder %s111, %s127
      %p129 = scmp.eq.s32.totalorder %s21, 0
      %p130 = por %p128, %p129
      %s131 = ssub.s32 %s23, %s30
      %s132 = ssub.s32 %s22, %s34
      %s133 = sor.u32 %s131, %s132
      %p134 = scmp.eq.s32.totalorder %s133, 0
      %s136 = sadd.s32 %s135, 1
      %s137 = scalar_select %p134, %s135, %s136
      %p140 = pneg %p134
      %p141 = scmp.eq.s32.totalorder %s15, 1
      %p142 = por %p140, %p141
      %p143 = scmp.ne.s32.totalorder %s135, %s138
      %p144 = scmp.eq.s32.totalorder %s15, 0
      %p145 = por %p143, %p144
      %p146 = scmp.ne.s32.totalorder %s135, %s138
      %p147 = scmp.eq.s32.totalorder %s20, 1
      %p148 = por %p146, %p147
      %p149 = scmp.ne.s32.totalorder %s138, %s139
      %p150 = scmp.eq.s32.totalorder %s20, 0
      %p151 = por %p149, %p150
      %p152 = scmp.ne.s32.totalorder %s138, %s139
      %p153 = scmp.eq.s32.totalorder %s21, 1
      %p154 = por %p152, %p153
      %p156 = scmp.ne.s32.totalorder %s139, %s155
      %p157 = scmp.eq.s32.totalorder %s21, 0
      %p158 = por %p156, %p157
      %p159 = scmp.le.s32.totalorder 1, %s15
      %p160 = scmp.lt.s32.totalorder %s15, 3
      %p161 = pnand %p159, %p160
      %p162 = pneg %p161
      // Predicated region
      $region9: #{tpu_custom_call.1} parent=5 // pred_check
        _
      $region10: #{tpu_custom_call.1} parent=5 // pred_check_branch
        %164 = sbr.rel (%p161) target = $region12
      $region11: #{tpu_custom_call.1} parent=5 // pred_region
        %s165 = ssub.s32 %s15, 1
        // Predicated region
        $region13: #{tpu_custom_call.1} parent=11 // pred_check
          %p166 = pneg %p48
        $region14: #{tpu_custom_call.1} parent=11 // pred_check_branch
          %168 = sbr.rel (%p166) target = $region16
        $region15: #{tpu_custom_call.1} parent=11 // pred_region
          %s170 = ssub.s32 64, 64
          %171 = vsyncadd [#allocation3], %s170
          %s173 = sshll.u32 [#allocation2], 4
          %s174 = int_to_ptr.vmem [resolvable:$true] %s173
          %176 = dma.hbm_to_vmem [thread:$0]  %s0, 64, %s174, [#allocation3]
        $region16: #{tpu_custom_call.1} parent=11 // pred_fallthru
          _
        // Predicated region
        $region17: #{tpu_custom_call.1} parent=11 // pred_check
          %p177 = pneg %p69
        $region18: #{tpu_custom_call.1} parent=11 // pred_check_branch
          %179 = sbr.rel (%p177) target = $region20
        $region19: #{tpu_custom_call.1} parent=11 // pred_region
          _
        $region20: #{tpu_custom_call.1} parent=11 // pred_fallthru
          _
        // Predicated region
        $region21: #{tpu_custom_call.1} parent=11 // pred_check
          %p180 = pneg %p95
        $region22: #{tpu_custom_call.1} parent=11 // pred_check_branch
          %182 = sbr.rel (%p180) target = $region24
        $region23: #{tpu_custom_call.1} parent=11 // pred_region
          %s183 = smul.u32 2, %s24
          %s185 = ssub.s32 128, 128
          %186 = vsyncadd [#allocation6], %s185
          %s187 = smul.addr %s183, 64
          %s188 = scalar_lea.hbm %s2, %s187
          %s190 = sshll.u32 [#allocation5], 4
          %s191 = int_to_ptr.vmem [resolvable:$true] %s190
          %193 = dma.hbm_to_vmem [thread:$0]  %s188, 128, %s191, [#allocation6]
        $region24: #{tpu_custom_call.1} parent=11 // pred_fallthru
          _
      $region12: #{tpu_custom_call.1} parent=5 // pred_fallthru
        _
      %p194 = scmp.lt.s32.totalorder %s15, 2
      // Predicated region
      $region25: #{tpu_custom_call.1} parent=5 // pred_check
        %p195 = pneg %p194
      $region26: #{tpu_custom_call.1} parent=5 // pred_check_branch
        %197 = sbr.rel (%p195) target = $region28
      $region27: #{tpu_custom_call.1} parent=5 // pred_region
        // Predicated region
        $region29: #{tpu_custom_call.1} parent=27 // pred_check
          %p198 = pneg %p117
        $region30: #{tpu_custom_call.1} parent=27 // pred_check_branch
          %200 = sbr.rel (%p198) target = $region32
        $region31: #{tpu_custom_call.1} parent=27 // pred_region
          %s201 = smul.u32 2, %s22
          %p202 = scmp.lt.s32.totalorder %s23, 1
          %s203 = scalar_select %p202, %s23, 1
          %p204 = scmp.lt.s32.totalorder %s201, 1
          %s205 = scalar_select %p204, %s201, 1
          %s206 = smul.addr %s203, 2
          %s207 = sadd.s32 %s205, %s206
          %s208 = smul.addr %s207, 4
          %s209 = scalar_lea.vmem %s3, %s208
          %s210 = smul.u32 2, %s22
        $region32: #{tpu_custom_call.1} parent=27 // pred_fallthru
          _
      $region28: #{tpu_custom_call.1} parent=5 // pred_fallthru
        _
      %p211 = scmp.le.s32.totalorder 1, %s15
      %p212 = scmp.lt.s32.totalorder %s15, 3
      %p213 = pnand %p211, %p212
      %p214 = pneg %p213
      // Predicated region
      $region33: #{tpu_custom_call.1} parent=5 // pred_check
        _
      $region34: #{tpu_custom_call.1} parent=5 // pred_check_branch
        %216 = sbr.rel (%p213) target = $region36
      $region35: #{tpu_custom_call.1} parent=5 // pred_region
        %s217 = ssub.s32 %s15, 1
        // Predicated region
        $region37: #{tpu_custom_call.1} parent=35 // pred_check
          %p218 = pneg %p48
        $region38: #{tpu_custom_call.1} parent=35 // pred_check_branch
          %220 = sbr.rel (%p218) target = $region40
        $region39: #{tpu_custom_call.1} parent=35 // pred_region
          %221 = dma.done [#allocation3], 64
        $region40: #{tpu_custom_call.1} parent=35 // pred_fallthru
          _
        // Predicated region
        $region41: #{tpu_custom_call.1} parent=35 // pred_check
          %p222 = pneg %p95
        $region42: #{tpu_custom_call.1} parent=35 // pred_check_branch
          %224 = sbr.rel (%p222) target = $region44
        $region43: #{tpu_custom_call.1} parent=35 // pred_region
          %225 = dma.done [#allocation6], 128
        $region44: #{tpu_custom_call.1} parent=35 // pred_fallthru
          _
        %p226 = pneg %p48
        %p227 = pneg %p45
        %p228 = pneg %p69
        %p229 = pneg %p66
        %p230 = pneg %p95
        %p231 = pneg %p92
        %s232 = smul.u32 2, %s24
        %p233 = scmp.lt.s32.totalorder %s25, 1
        %s234 = scalar_select %p233, %s25, 1
        %p235 = scmp.lt.s32.totalorder %s232, 1
        %s236 = scalar_select %p235, %s232, 1
        %s237 = smul.addr %s234, 2
        %s238 = sadd.s32 %s236, %s237
        %s239 = smul.addr %s238, 4
        %s240 = scalar_lea.vmem %s3, %s239
        %p241 = pneg %p123
        %p242 = pneg %p120
        %p243 = pneg %p151
        %p244 = pneg %p148
        %s245 = sand.u32 %s138, 1
        %s246 = scalar_lea.sflag [#allocation4], %s245
        %s247 = sand.u32 %s138, 1
        %s248 = smul.addr %s247, 8
        %s249 = scalar_lea.vmem [#allocation7], %s248
        %s250 = smul.u32 2, %s24
        %s251 = smul.u32 2, %s24
        %p252 = scmp.lt.s32.totalorder %s25, 1
        %s253 = scalar_select %p252, %s25, 1
        %p254 = scmp.lt.s32.totalorder %s251, 1
        %s255 = scalar_select %p254, %s251, 1
        %s256 = smul.addr %s253, 2
        %s257 = sadd.s32 %s255, %s256
        %s258 = smul.addr %s257, 4
        %s259 = scalar_lea.vmem %s3, %s258
        %s260 = smul.u32 2, %s24
        %s261 = smul.u32 2, %s24
        %v262 = vld [vmem:[%s259] sm:$0xff]
        %v263 = vld [vmem:[#allocation5] sm:$0xff]
        %v264 = vmul.f32 %v262, %v263
        %v265 = vld [vmem:[#allocation2] sm:$0xf]
        %v266 = vld [vmem:[%s1] sm:$0xf]
        %268 = vset.pattern.permute.xlu0 0
        %269 = vperm.xlu0 %268, %v266
        %v270 = vpop.permute.xlu0 %269
        %v273 = vcombine.high %v264, %v264
        %vm274 = vcmask 31744
        %v276 = vsel %vm274, %v265, 0
        %vm278 = vcmask 1043456
        %v279 = vsel %vm278, %v264, 0
        %v281 = vsel %vm278, %v273, 0
        %v283 = vand.u32 %v281, 4294901760
        %284 = vmatprep.subr.mxu0 %v283
        %v285 = vand.u32 %v279, 4294901760
        %286 = vmatpush1.msra.mxu0 %v285
        %287 = vmatprep.subr.mxu0 0.0
        %288 = vmatpush1.msra.mxu0 0.0
        %289 = vmatprep.subr.mxu0 0.0
        %290 = vmatpush1.msra.mxu0 0.0
        %291 = vmatprep.subr.mxu0 0.0
        %292 = vmatpush1.msra.mxu0 0.0
        %293 = vmatprep.subr.mxu0 0.0
        %294 = vmatpush1.msra.mxu0 0.0
        %295 = vmatprep.subr.mxu0 0.0
        %296 = vmatpush1.msra.mxu0 0.0
        %297 = vmatprep.subr.mxu0 0.0
        %298 = vmatpush1.msra.mxu0 0.0
        %299 = vmatprep.subr.mxu0 0.0
        %300 = vmatpush1.msra.mxu0 0.0
        %301 = vmatprep.subr.mxu0 0.0
        %302 = vmatpush1.msra.mxu0 0.0
        %303 = vmatprep.subr.mxu0 0.0
        %304 = vmatpush1.msra.mxu0 0.0
        %305 = vmatprep.subr.mxu0 0.0
        %306 = vmatpush1.msra.mxu0 0.0
        %307 = vmatprep.subr.mxu0 0.0
        %308 = vmatpush1.msra.mxu0 0.0
        %309 = vmatprep.subr.mxu0 0.0
        %310 = vmatpush1.msra.mxu0 0.0
        %311 = vmatprep.subr.mxu0 0.0
        %312 = vmatpush1.msra.mxu0 0.0
        %313 = vmatprep.subr.mxu0 0.0
        %314 = vmatpush1.msra.mxu0 0.0
        %315 = vmatprep.subr.mxu0 0.0
        %316 = vmatpush1.msra.mxu0 0.0
        %317 = vmatprep.subr.mxu0 0.0
        %318 = vmatpush1.msra.mxu0 0.0
        %319 = vmatprep.subr.mxu0 0.0
        %320 = vmatpush1.msra.mxu0 0.0
        %321 = vmatprep.subr.mxu0 0.0
        %322 = vmatpush1.msra.mxu0 0.0
        %323 = vmatprep.subr.mxu0 0.0
        %324 = vmatpush1.msra.mxu0 0.0
        %325 = vmatprep.subr.mxu0 0.0
        %326 = vmatpush1.msra.mxu0 0.0
        %327 = vmatprep.subr.mxu0 0.0
        %328 = vmatpush1.msra.mxu0 0.0
        %329 = vmatprep.subr.mxu0 0.0
        %330 = vmatpush1.msra.mxu0 0.0
        %331 = vmatprep.subr.mxu0 0.0
        %332 = vmatpush1.msra.mxu0 0.0
        %333 = vmatprep.subr.mxu0 0.0
        %334 = vmatpush1.msra.mxu0 0.0
        %335 = vmatprep.subr.mxu0 0.0
        %336 = vmatpush1.msra.mxu0 0.0
        %337 = vmatprep.subr.mxu0 0.0
        %338 = vmatpush1.msra.mxu0 0.0
        %339 = vmatprep.subr.mxu0 0.0
        %340 = vmatpush1.msra.mxu0 0.0
        %341 = vmatprep.subr.mxu0 0.0
        %342 = vmatpush1.msra.mxu0 0.0
        %343 = vmatprep.subr.mxu0 0.0
        %344 = vmatpush1.msra.mxu0 0.0
        %345 = vmatprep.subr.mxu0 0.0
        %346 = vmatpush1.msra.mxu0 0.0
        %347 = vmatprep.subr.mxu0 0.0
        %348 = vmatpush1.msra.mxu0 0.0
        %349 = vmatprep.mubr.f32.mxu0 0.0
        %v350 = vand.u32 %v276, 4294901760
        %v351 = vsub.f32 %v276, %v350
        %v352 = vand.u32 %v351, 4294901760
        %v353 = vsub.f32 %v351, %v352
        %v354 = vand.u32 %v353, 4294901760
        %355 = vmatmul.mubr.f32.gmra.mrb[0].mxu0 %v354
        %v356 = vpop.f32.mrb[0].mxu0
        %v357 = vadd.f32 %v270, %v356
        %v358 = vpop.f32.mrb[0].mxu0
        %v359 = vadd.f32 %v270, %v358
        %360 = vdwg.mxu0
        %v361 = vand.u32 %v281, 4294901760
        %v362 = vsub.f32 %v281, %v361
        %v363 = vand.u32 %v362, 4294901760
        %v364 = vsub.f32 %v362, %v363
        %v365 = vand.u32 %v364, 4294901760
        %366 = vmatprep.subr.mxu0 %v365
        %v367 = vand.u32 %v279, 4294901760
        %v368 = vsub.f32 %v279, %v367
        %v369 = vand.u32 %v368, 4294901760
        %v370 = vsub.f32 %v368, %v369
        %v371 = vand.u32 %v370, 4294901760
        %372 = vmatpush1.msra.mxu0 %v371
        %373 = vmatprep.subr.mxu0 0.0
        %374 = vmatpush1.msra.mxu0 0.0
        %375 = vmatprep.subr.mxu0 0.0
        %376 = vmatpush1.msra.mxu0 0.0
        %377 = vmatprep.subr.mxu0 0.0
        %378 = vmatpush1.msra.mxu0 0.0
        %379 = vmatprep.subr.mxu0 0.0
        %380 = vmatpush1.msra.mxu0 0.0
        %381 = vmatprep.subr.mxu0 0.0
        %382 = vmatpush1.msra.mxu0 0.0
        %383 = vmatprep.subr.mxu0 0.0
        %384 = vmatpush1.msra.mxu0 0.0
        %385 = vmatprep.subr.mxu0 0.0
        %386 = vmatpush1.msra.mxu0 0.0
        %387 = vmatprep.subr.mxu0 0.0
        %388 = vmatpush1.msra.mxu0 0.0
        %389 = vmatprep.subr.mxu0 0.0
        %390 = vmatpush1.msra.mxu0 0.0
        %391 = vmatprep.subr.mxu0 0.0
        %392 = vmatpush1.msra.mxu0 0.0
        %393 = vmatprep.subr.mxu0 0.0
        %394 = vmatpush1.msra.mxu0 0.0
        %395 = vmatprep.subr.mxu0 0.0
        %396 = vmatpush1.msra.mxu0 0.0
        %397 = vmatprep.subr.mxu0 0.0
        %398 = vmatpush1.msra.mxu0 0.0
        %399 = vmatprep.subr.mxu0 0.0
        %400 = vmatpush1.msra.mxu0 0.0
        %401 = vmatprep.subr.mxu0 0.0
        %402 = vmatpush1.msra.mxu0 0.0
        %403 = vmatprep.subr.mxu0 0.0
        %404 = vmatpush1.msra.mxu0 0.0
        %405 = vmatprep.subr.mxu0 0.0
        %406 = vmatpush1.msra.mxu0 0.0
        %407 = vmatprep.subr.mxu0 0.0
        %408 = vmatpush1.msra.mxu0 0.0
        %409 = vmatprep.subr.mxu0 0.0
        %410 = vmatpush1.msra.mxu0 0.0
        %411 = vmatprep.subr.mxu0 0.0
        %412 = vmatpush1.msra.mxu0 0.0
        %413 = vmatprep.subr.mxu0 0.0
        %414 = vmatpush1.msra.mxu0 0.0
        %415 = vmatprep.subr.mxu0 0.0
        %416 = vmatpush1.msra.mxu0 0.0
        %417 = vmatprep.subr.mxu0 0.0
        %418 = vmatpush1.msra.mxu0 0.0
        %419 = vmatprep.subr.mxu0 0.0
        %420 = vmatpush1.msra.mxu0 0.0
        %421 = vmatprep.subr.mxu0 0.0
        %422 = vmatpush1.msra.mxu0 0.0
        %423 = vmatprep.subr.mxu0 0.0
        %424 = vmatpush1.msra.mxu0 0.0
        %425 = vmatprep.subr.mxu0 0.0
        %426 = vmatpush1.msra.mxu0 0.0
        %427 = vmatprep.subr.mxu0 0.0
        %428 = vmatpush1.msra.mxu0 0.0
        %429 = vmatprep.subr.mxu0 0.0
        %430 = vmatpush1.msra.mxu0 0.0
        %431 = vmatprep.subr.mxu0 0.0
        %432 = vmatpush1.msra.mxu0 0.0
        %433 = vmatprep.subr.mxu0 0.0
        %434 = vmatpush1.msra.mxu0 0.0
        %435 = vmatprep.mubr.f32.mxu0 0.0
        %v436 = vand.u32 %v276, 4294901760
        %437 = vmatmul.mubr.f32.gmra.mrb[0].mxu0 %v436
        %v438 = vpop.f32.mrb[0].mxu0
        %v439 = vadd.f32 %v357, %v438
        %v440 = vpop.f32.mrb[0].mxu0
        %v441 = vadd.f32 %v359, %v440
        %442 = vdwg.mxu0
        %v443 = vand.u32 %v281, 4294901760
        %v444 = vsub.f32 %v281, %v443
        %445 = vmatprep.subr.mxu0 %v444
        %v446 = vand.u32 %v279, 4294901760
        %v447 = vsub.f32 %v279, %v446
        %448 = vmatpush1.msra.mxu0 %v447
        %449 = vmatprep.subr.mxu0 0.0
        %450 = vmatpush1.msra.mxu0 0.0
        %451 = vmatprep.subr.mxu0 0.0
        %452 = vmatpush1.msra.mxu0 0.0
        %453 = vmatprep.subr.mxu0 0.0
        %454 = vmatpush1.msra.mxu0 0.0
        %455 = vmatprep.subr.mxu0 0.0
        %456 = vmatpush1.msra.mxu0 0.0
        %457 = vmatprep.subr.mxu0 0.0
        %458 = vmatpush1.msra.mxu0 0.0
        %459 = vmatprep.subr.mxu0 0.0
        %460 = vmatpush1.msra.mxu0 0.0
        %461 = vmatprep.subr.mxu0 0.0
        %462 = vmatpush1.msra.mxu0 0.0
        %463 = vmatprep.subr.mxu0 0.0
        %464 = vmatpush1.msra.mxu0 0.0
        %465 = vmatprep.subr.mxu0 0.0
        %466 = vmatpush1.msra.mxu0 0.0
        %467 = vmatprep.subr.mxu0 0.0
        %468 = vmatpush1.msra.mxu0 0.0
        %469 = vmatprep.subr.mxu0 0.0
        %470 = vmatpush1.msra.mxu0 0.0
        %471 = vmatprep.subr.mxu0 0.0
        %472 = vmatpush1.msra.mxu0 0.0
        %473 = vmatprep.subr.mxu0 0.0
        %474 = vmatpush1.msra.mxu0 0.0
        %475 = vmatprep.subr.mxu0 0.0
        %476 = vmatpush1.msra.mxu0 0.0
        %477 = vmatprep.subr.mxu0 0.0
        %478 = vmatpush1.msra.mxu0 0.0
        %479 = vmatprep.subr.mxu0 0.0
        %480 = vmatpush1.msra.mxu0 0.0
        %481 = vmatprep.subr.mxu0 0.0
        %482 = vmatpush1.msra.mxu0 0.0
        %483 = vmatprep.subr.mxu0 0.0
        %484 = vmatpush1.msra.mxu0 0.0
        %485 = vmatprep.subr.mxu0 0.0
        %486 = vmatpush1.msra.mxu0 0.0
        %487 = vmatprep.subr.mxu0 0.0
        %488 = vmatpush1.msra.mxu0 0.0
        %489 = vmatprep.subr.mxu0 0.0
        %490 = vmatpush1.msra.mxu0 0.0
        %491 = vmatprep.subr.mxu0 0.0
        %492 = vmatpush1.msra.mxu0 0.0
        %493 = vmatprep.subr.mxu0 0.0
        %494 = vmatpush1.msra.mxu0 0.0
        %495 = vmatprep.subr.mxu0 0.0
        %496 = vmatpush1.msra.mxu0 0.0
        %497 = vmatprep.subr.mxu0 0.0
        %498 = vmatpush1.msra.mxu0 0.0
        %499 = vmatprep.subr.mxu0 0.0
        %500 = vmatpush1.msra.mxu0 0.0
        %501 = vmatprep.subr.mxu0 0.0
        %502 = vmatpush1.msra.mxu0 0.0
        %503 = vmatprep.subr.mxu0 0.0
        %504 = vmatpush1.msra.mxu0 0.0
        %505 = vmatprep.subr.mxu0 0.0
        %506 = vmatpush1.msra.mxu0 0.0
        %507 = vmatprep.subr.mxu0 0.0
        %508 = vmatpush1.msra.mxu0 0.0
        %509 = vmatprep.subr.mxu0 0.0
        %510 = vmatpush1.msra.mxu0 0.0
        %511 = vmatprep.mubr.f32.mxu0 0.0
        %v512 = vand.u32 %v276, 4294901760
        %v513 = vsub.f32 %v276, %v512
        %514 = vmatmul.mubr.f32.gmra.mrb[0].mxu0 %v513
        %v515 = vpop.f32.mrb[0].mxu0
        %v516 = vadd.f32 %v439, %v515
        %v517 = vpop.f32.mrb[0].mxu0
        %v518 = vadd.f32 %v441, %v517
        %519 = vdwg.mxu0
        %v520 = vand.u32 %v281, 4294901760
        %521 = vmatprep.subr.mxu0 %v520
        %v522 = vand.u32 %v279, 4294901760
        %523 = vmatpush1.msra.mxu0 %v522
        %524 = vmatprep.subr.mxu0 0.0
        %525 = vmatpush1.msra.mxu0 0.0
        %526 = vmatprep.subr.mxu0 0.0
        %527 = vmatpush1.msra.mxu0 0.0
        %528 = vmatprep.subr.mxu0 0.0
        %529 = vmatpush1.msra.mxu0 0.0
        %530 = vmatprep.subr.mxu0 0.0
        %531 = vmatpush1.msra.mxu0 0.0
        %532 = vmatprep.subr.mxu0 0.0
        %533 = vmatpush1.msra.mxu0 0.0
        %534 = vmatprep.subr.mxu0 0.0
        %535 = vmatpush1.msra.mxu0 0.0
        %536 = vmatprep.subr.mxu0 0.0
        %537 = vmatpush1.msra.mxu0 0.0
        %538 = vmatprep.subr.mxu0 0.0
        %539 = vmatpush1.msra.mxu0 0.0
        %540 = vmatprep.subr.mxu0 0.0
        %541 = vmatpush1.msra.mxu0 0.0
        %542 = vmatprep.subr.mxu0 0.0
        %543 = vmatpush1.msra.mxu0 0.0
        %544 = vmatprep.subr.mxu0 0.0
        %545 = vmatpush1.msra.mxu0 0.0
        %546 = vmatprep.subr.mxu0 0.0
        %547 = vmatpush1.msra.mxu0 0.0
        %548 = vmatprep.subr.mxu0 0.0
        %549 = vmatpush1.msra.mxu0 0.0
        %550 = vmatprep.subr.mxu0 0.0
        %551 = vmatpush1.msra.mxu0 0.0
        %552 = vmatprep.subr.mxu0 0.0
        %553 = vmatpush1.msra.mxu0 0.0
        %554 = vmatprep.subr.mxu0 0.0
        %555 = vmatpush1.msra.mxu0 0.0
        %556 = vmatprep.subr.mxu0 0.0
        %557 = vmatpush1.msra.mxu0 0.0
        %558 = vmatprep.subr.mxu0 0.0
        %559 = vmatpush1.msra.mxu0 0.0
        %560 = vmatprep.subr.mxu0 0.0
        %561 = vmatpush1.msra.mxu0 0.0
        %562 = vmatprep.subr.mxu0 0.0
        %563 = vmatpush1.msra.mxu0 0.0
        %564 = vmatprep.subr.mxu0 0.0
        %565 = vmatpush1.msra.mxu0 0.0
        %566 = vmatprep.subr.mxu0 0.0
        %567 = vmatpush1.msra.mxu0 0.0
        %568 = vmatprep.subr.mxu0 0.0
        %569 = vmatpush1.msra.mxu0 0.0
        %570 = vmatprep.subr.mxu0 0.0
        %571 = vmatpush1.msra.mxu0 0.0
        %572 = vmatprep.subr.mxu0 0.0
        %573 = vmatpush1.msra.mxu0 0.0
        %574 = vmatprep.subr.mxu0 0.0
        %575 = vmatpush1.msra.mxu0 0.0
        %576 = vmatprep.subr.mxu0 0.0
        %577 = vmatpush1.msra.mxu0 0.0
        %578 = vmatprep.subr.mxu0 0.0
        %579 = vmatpush1.msra.mxu0 0.0
        %580 = vmatprep.subr.mxu0 0.0
        %581 = vmatpush1.msra.mxu0 0.0
        %582 = vmatprep.subr.mxu0 0.0
        %583 = vmatpush1.msra.mxu0 0.0
        %584 = vmatprep.subr.mxu0 0.0
        %585 = vmatpush1.msra.mxu0 0.0
        %586 = vmatprep.mubr.f32.mxu0 0.0
        %v587 = vand.u32 %v276, 4294901760
        %v588 = vsub.f32 %v276, %v587
        %v589 = vand.u32 %v588, 4294901760
        %590 = vmatmul.mubr.f32.gmra.mrb[0].mxu0 %v589
        %v591 = vpop.f32.mrb[0].mxu0
        %v592 = vadd.f32 %v516, %v591
        %v593 = vpop.f32.mrb[0].mxu0
        %v594 = vadd.f32 %v518, %v593
        %595 = vdwg.mxu0
        %v596 = vand.u32 %v281, 4294901760
        %v597 = vsub.f32 %v281, %v596
        %v598 = vand.u32 %v597, 4294901760
        %599 = vmatprep.subr.mxu0 %v598
        %v600 = vand.u32 %v279, 4294901760
        %v601 = vsub.f32 %v279, %v600
        %v602 = vand.u32 %v601, 4294901760
        %603 = vmatpush1.msra.mxu0 %v602
        %604 = vmatprep.subr.mxu0 0.0
        %605 = vmatpush1.msra.mxu0 0.0
        %606 = vmatprep.subr.mxu0 0.0
        %607 = vmatpush1.msra.mxu0 0.0
        %608 = vmatprep.subr.mxu0 0.0
        %609 = vmatpush1.msra.mxu0 0.0
        %610 = vmatprep.subr.mxu0 0.0
        %611 = vmatpush1.msra.mxu0 0.0
        %612 = vmatprep.subr.mxu0 0.0
        %613 = vmatpush1.msra.mxu0 0.0
        %614 = vmatprep.subr.mxu0 0.0
        %615 = vmatpush1.msra.mxu0 0.0
        %616 = vmatprep.subr.mxu0 0.0
        %617 = vmatpush1.msra.mxu0 0.0
        %618 = vmatprep.subr.mxu0 0.0
        %619 = vmatpush1.msra.mxu0 0.0
        %620 = vmatprep.subr.mxu0 0.0
        %621 = vmatpush1.msra.mxu0 0.0
        %622 = vmatprep.subr.mxu0 0.0
        %623 = vmatpush1.msra.mxu0 0.0
        %624 = vmatprep.subr.mxu0 0.0
        %625 = vmatpush1.msra.mxu0 0.0
        %626 = vmatprep.subr.mxu0 0.0
        %627 = vmatpush1.msra.mxu0 0.0
        %628 = vmatprep.subr.mxu0 0.0
        %629 = vmatpush1.msra.mxu0 0.0
        %630 = vmatprep.subr.mxu0 0.0
        %631 = vmatpush1.msra.mxu0 0.0
        %632 = vmatprep.subr.mxu0 0.0
        %633 = vmatpush1.msra.mxu0 0.0
        %634 = vmatprep.subr.mxu0 0.0
        %635 = vmatpush1.msra.mxu0 0.0
        %636 = vmatprep.subr.mxu0 0.0
        %637 = vmatpush1.msra.mxu0 0.0
        %638 = vmatprep.subr.mxu0 0.0
        %639 = vmatpush1.msra.mxu0 0.0
        %640 = vmatprep.subr.mxu0 0.0
        %641 = vmatpush1.msra.mxu0 0.0
        %642 = vmatprep.subr.mxu0 0.0
        %643 = vmatpush1.msra.mxu0 0.0
        %644 = vmatprep.subr.mxu0 0.0
        %645 = vmatpush1.msra.mxu0 0.0
        %646 = vmatprep.subr.mxu0 0.0
        %647 = vmatpush1.msra.mxu0 0.0
        %648 = vmatprep.subr.mxu0 0.0
        %649 = vmatpush1.msra.mxu0 0.0
        %650 = vmatprep.subr.mxu0 0.0
        %651 = vmatpush1.msra.mxu0 0.0
        %652 = vmatprep.subr.mxu0 0.0
        %653 = vmatpush1.msra.mxu0 0.0
        %654 = vmatprep.subr.mxu0 0.0
        %655 = vmatpush1.msra.mxu0 0.0
        %656 = vmatprep.subr.mxu0 0.0
        %657 = vmatpush1.msra.mxu0 0.0
        %658 = vmatprep.subr.mxu0 0.0
        %659 = vmatpush1.msra.mxu0 0.0
        %660 = vmatprep.subr.mxu0 0.0
        %661 = vmatpush1.msra.mxu0 0.0
        %662 = vmatprep.subr.mxu0 0.0
        %663 = vmatpush1.msra.mxu0 0.0
        %664 = vmatprep.subr.mxu0 0.0
        %665 = vmatpush1.msra.mxu0 0.0
        %666 = vmatprep.mubr.f32.mxu0 0.0
        %v667 = vand.u32 %v276, 4294901760
        %668 = vmatmul.mubr.f32.gmra.mrb[0].mxu0 %v667
        %v669 = vpop.f32.mrb[0].mxu0
        %v670 = vadd.f32 %v592, %v669
        %v671 = vpop.f32.mrb[0].mxu0
        %v672 = vadd.f32 %v594, %v671
        %673 = vdwg.mxu0
        %v674 = vand.u32 %v281, 4294901760
        %675 = vmatprep.subr.mxu0 %v674
        %v676 = vand.u32 %v279, 4294901760
        %677 = vmatpush1.msra.mxu0 %v676
        %678 = vmatprep.subr.mxu0 0.0
        %679 = vmatpush1.msra.mxu0 0.0
        %680 = vmatprep.subr.mxu0 0.0
        %681 = vmatpush1.msra.mxu0 0.0
        %682 = vmatprep.subr.mxu0 0.0
        %683 = vmatpush1.msra.mxu0 0.0
        %684 = vmatprep.subr.mxu0 0.0
        %685 = vmatpush1.msra.mxu0 0.0
        %686 = vmatprep.subr.mxu0 0.0
        %687 = vmatpush1.msra.mxu0 0.0
        %688 = vmatprep.subr.mxu0 0.0
        %689 = vmatpush1.msra.mxu0 0.0
        %690 = vmatprep.subr.mxu0 0.0
        %691 = vmatpush1.msra.mxu0 0.0
        %692 = vmatprep.subr.mxu0 0.0
        %693 = vmatpush1.msra.mxu0 0.0
        %694 = vmatprep.subr.mxu0 0.0
        %695 = vmatpush1.msra.mxu0 0.0
        %696 = vmatprep.subr.mxu0 0.0
        %697 = vmatpush1.msra.mxu0 0.0
        %698 = vmatprep.subr.mxu0 0.0
        %699 = vmatpush1.msra.mxu0 0.0
        %700 = vmatprep.subr.mxu0 0.0
        %701 = vmatpush1.msra.mxu0 0.0
        %702 = vmatprep.subr.mxu0 0.0
        %703 = vmatpush1.msra.mxu0 0.0
        %704 = vmatprep.subr.mxu0 0.0
        %705 = vmatpush1.msra.mxu0 0.0
        %706 = vmatprep.subr.mxu0 0.0
        %707 = vmatpush1.msra.mxu0 0.0
        %708 = vmatprep.subr.mxu0 0.0
        %709 = vmatpush1.msra.mxu0 0.0
        %710 = vmatprep.subr.mxu0 0.0
        %711 = vmatpush1.msra.mxu0 0.0
        %712 = vmatprep.subr.mxu0 0.0
        %713 = vmatpush1.msra.mxu0 0.0
        %714 = vmatprep.subr.mxu0 0.0
        %715 = vmatpush1.msra.mxu0 0.0
        %716 = vmatprep.subr.mxu0 0.0
        %717 = vmatpush1.msra.mxu0 0.0
        %718 = vmatprep.subr.mxu0 0.0
        %719 = vmatpush1.msra.mxu0 0.0
        %720 = vmatprep.subr.mxu0 0.0
        %721 = vmatpush1.msra.mxu0 0.0
        %722 = vmatprep.subr.mxu0 0.0
        %723 = vmatpush1.msra.mxu0 0.0
        %724 = vmatprep.subr.mxu0 0.0
        %725 = vmatpush1.msra.mxu0 0.0
        %726 = vmatprep.subr.mxu0 0.0
        %727 = vmatpush1.msra.mxu0 0.0
        %728 = vmatprep.subr.mxu0 0.0
        %729 = vmatpush1.msra.mxu0 0.0
        %730 = vmatprep.subr.mxu0 0.0
        %731 = vmatpush1.msra.mxu0 0.0
        %732 = vmatprep.subr.mxu0 0.0
        %733 = vmatpush1.msra.mxu0 0.0
        %734 = vmatprep.subr.mxu0 0.0
        %735 = vmatpush1.msra.mxu0 0.0
        %736 = vmatprep.subr.mxu0 0.0
        %737 = vmatpush1.msra.mxu0 0.0
        %738 = vmatprep.subr.mxu0 0.0
        %739 = vmatpush1.msra.mxu0 0.0
        %740 = vmatprep.mubr.f32.mxu0 0.0
        %v741 = vand.u32 %v276, 4294901760
        %742 = vmatmul.mubr.f32.gmra.mrb[0].mxu0 %v741
        %v743 = vpop.f32.mrb[0].mxu0
        %v744 = vadd.f32 %v670, %v743
        %v745 = vpop.f32.mrb[0].mxu0
        %v746 = vadd.f32 %v672, %v745
        %747 = vdwg.mxu0
        %v750 = vcombine.low %v744, %v746
        %752 = vst [vmem:[%s249] sm:$0xff] %v750
        %s753 = sand.u32 %s138, 1
        %s754 = scalar_lea.sflag [#allocation4], %s753
        %s755 = sand.u32 %s138, 1
        %s756 = smul.addr %s755, 8
        %s757 = scalar_lea.vmem [#allocation7], %s756
        // Predicated region
        $region45: #{tpu_custom_call.1} parent=35 // pred_check
          %p758 = pneg %p148
        $region46: #{tpu_custom_call.1} parent=35 // pred_check_branch
          %760 = sbr.rel (%p758) target = $region48
        $region47: #{tpu_custom_call.1} parent=35 // pred_region
          %s761 = smul.u32 2, %s24
          %s763 = ssub.s32 128, 128
          %764 = vsyncadd %s754, %s763
          %s765 = smul.addr %s25, 2
          %s766 = sadd.s32 %s761, %s765
          %s767 = smul.addr %s766, 64
          %s768 = scalar_lea.hbm %s4, %s767
          %s770 = sshll.u32 %s757, 4
          %s771 = int_to_ptr.vmem [resolvable:$true] %s770
          %773 = dma.vmem_to_hbm [thread:$0]  %s771, 128, %s768, %s754
        $region48: #{tpu_custom_call.1} parent=35 // pred_fallthru
          _
      $region36: #{tpu_custom_call.1} parent=5 // pred_fallthru
        _
      %p774 = scmp.le.s32.totalorder 2, %s15
      // Predicated region
      $region49: #{tpu_custom_call.1} parent=5 // pred_check
        %p775 = pneg %p774
      $region50: #{tpu_custom_call.1} parent=5 // pred_check_branch
        %777 = sbr.rel (%p775) target = $region52
      $region51: #{tpu_custom_call.1} parent=5 // pred_region
        %s778 = ssub.s32 %s15, 2
        // Predicated region
        $region53: #{tpu_custom_call.1} parent=51 // pred_check
          %p779 = pneg %p154
        $region54: #{tpu_custom_call.1} parent=51 // pred_check_branch
          %781 = sbr.rel (%p779) target = $region56
        $region55: #{tpu_custom_call.1} parent=51 // pred_region
          %s782 = sand.u32 %s139, 1
          %s783 = scalar_lea.sflag [#allocation4], %s782
          %s784 = sand.u32 %s139, 1
          %s785 = smul.addr %s784, 8
          %s786 = scalar_lea.vmem [#allocation7], %s785
          %787 = dma.done %s783, 128
        $region56: #{tpu_custom_call.1} parent=51 // pred_fallthru
          _
      $region52: #{tpu_custom_call.1} parent=5 // pred_fallthru
        _
    $region6: #{tpu_custom_call.1} parent=1 // loop_footer
      %s19 = sadd.s32 1, %s15
    $region7: #{tpu_custom_call.1} parent=1 // loop_footer_branch
      %14 = sbr.rel target = $region3
    $region8: #{tpu_custom_call.1} parent=1 // loop_exit
      _
    %788 = vsyncpa [#allocation3], 1
    %s789 = scalar_lea.sflag [#allocation3], 1
    %790 = vsyncpa %s789, 1
    %791 = vsyncpa [#allocation6], 1
    %792 = vsyncpa [#allocation4], 1
    %s793 = scalar_lea.sflag [#allocation4], 1
    %794 = vsyncpa %s793, 1

</llo_original>
